<compile_context>
chip_gen: v7x
topology: tpu7x:2x2x1
jax: 0.10.0
libtpu: 0.0.40
codegen_flags: <defaults>
</compile_context>

<pallas_src>
import jax
import jax.numpy as jnp
from jax.experimental import pallas as pl
from jax.experimental.pallas import tpu as pltpu


def _cdiv(a, b):
    return -(-a // b)


def _round_up(a, m):
    return _cdiv(a, m) * m


def _num_tensorcores():
    """2 TensorCores on v7x, 1 elsewhere (perf heuristic only)."""
    try:
        kind = jax.devices()[0].device_kind.lower().replace(" ", "")
        if "v7" in kind or "tpu7" in kind:
            return 2
    except Exception:
        pass
    return 1


def _ce_kernel(logits_ref, gcol_ref, out_ref):
    """Masked CE over one (tm, W) tile; W = k*C lanes pack k rows of C classes.

    gcol[r, g] is the target column g*C + label of packed row r / segment g,
    or -1 when that original row is invalid (padding or beyond seq/med length).
    The per-core running NLL sum lives in the (1, 1) output block, VMEM-resident
    across the inner ("arbitrary") grid axis.
    """
    i = pl.program_id(1)

    @pl.when(i == 0)
    def _init():
        out_ref[...] = jnp.zeros_like(out_ref)

    x = logits_ref[...].astype(jnp.float32)            # (tm, W) full lane width
    gcol = gcol_ref[...]                                # (tm, k) int32
    W = x.shape[-1]
    k = gcol.shape[-1]
    C = W // k

    col = jax.lax.broadcasted_iota(jnp.int32, (1, W), 1)        # lane index

    # Shared softmax stabilizer per packed row (the k packed rows come from the
    # same model head, so their scales match; logits assumed finite).
    stab = jnp.max(x, axis=-1, keepdims=True)                   # (tm, 1)
    e = jnp.exp(x - stab)                                       # (tm, W) on EUP

    # Fused traversal: label-pick and segmented sum-of-exp from the same tile.
    # TODO(synk): an MXU one-hot matmul (e @ S) could replace the per-segment
    # lane reductions if the remaining VPU/XLU work ever binds (bf16 inputs).
    picked = jnp.zeros_like(x)
    sexp_cols = []
    for g in range(k):                                          # static, k <= 8
        gcol_g = gcol[:, g:g + 1]                               # (tm, 1)
        picked = jnp.where(col == gcol_g, x, picked)            # disjoint hits
        seg_g = (col >= g * C) & (col < (g + 1) * C)            # (1, W) constant
        sexp_cols.append(jnp.sum(jnp.where(seg_g, e, 0.0),
                                 axis=-1, keepdims=True))       # (tm, 1)
    sexp = sexp_cols[0] if k == 1 else jnp.concatenate(sexp_cols, axis=-1)

    valid = gcol >= 0                                           # (tm, k)
    lse = stab + jnp.log(sexp)                                  # one log per row
    step_nll = jnp.sum(jnp.where(valid, lse, 0.0)) - jnp.sum(picked)

    out_ref[...] += step_nll


def masked_cross_entropy_pallas(logits_flat, labels_flat, valid_flat, *,
                                tile_bytes=None, num_cores=None, min_steps=8):
    """Mean cross-entropy over rows of (N, C) logits where valid_flat is True.

    logits_flat stays in its source dtype (bf16 welcome); labels must lie in
    [0, C) for valid rows (not range-checked, like the reference it is UB).
    """
    N, C = logits_flat.shape
    itemsize = jnp.dtype(logits_flat.dtype).itemsize
    if num_cores is None:
        num_cores = _num_tensorcores()

    # Exact integer valid-row count on the wrapper side (no count accumulator).
    count = jnp.sum(valid_flat).astype(jnp.float32)

    # --- lane-dense repack factor: k original rows per packed row -----------
    k = max(1, min(128 // C, 8)) if C < 128 else 1
    W = k * C
    w_padded = _round_up(W, 128)                     # lane-padded width in VMEM

    # --- tile sizing against the lane-padded, double-buffered footprint -----
    if tile_bytes is None:
        # v7x: 64 MiB VMEM / TensorCore -> smaller tiles; v5e/v6e: 128 MiB.
        tile_bytes = (2 << 20) if num_cores > 1 else (4 << 20)
    row_bytes = w_padded * itemsize + 128 * 4        # logits + lane-padded gcol
    tm = max(8, min((tile_bytes // row_bytes) // 8 * 8, 16384))

    # --- cap tm so grid-padding waste stays <= ~1/min_steps of the data -----
    np0 = _cdiv(N, k)                                # packed rows before padding
    tm = max(8, min(tm, _round_up(_cdiv(np0, num_cores * min_steps), 8)))

    steps = _cdiv(np0, num_cores * tm)
    np_pad = num_cores * steps * tm                  # packed rows after padding
    n_pad = np_pad * k

    pad = n_pad - N
    if pad:
        logits_flat = jnp.pad(logits_flat, ((0, pad), (0, 0)))
        labels_flat = jnp.pad(labels_flat, ((0, pad),))
        valid_flat = jnp.pad(valid_flat, ((0, pad),))

    logits_packed = logits_flat.reshape(np_pad, W)   # contiguous reshape (free)
    lbl = labels_flat.astype(jnp.int32).reshape(np_pad, k)
    vld = valid_flat.reshape(np_pad, k)
    # Mask merged into labels: per-segment target column inside the packed row,
    # sentinel -1 for invalid rows (never matches a lane, excluded from lse).
    gcol = jnp.where(vld,
                     lbl + jnp.arange(k, dtype=jnp.int32)[None, :] * C,
                     jnp.int32(-1))

    cost = pl.CostEstimate(
        flops=int(10 * np_pad * W),
        transcendentals=int(np_pad * W + np_pad * k),         # exp + log
        bytes_accessed=int(np_pad * W * itemsize + np_pad * k * 4
                           + num_cores * 4),
    )

    partial = pl.pallas_call(
        _ce_kernel,
        out_shape=jax.ShapeDtypeStruct((num_cores, 1), jnp.float32),
        grid_spec=pltpu.PrefetchScalarGridSpec(
            num_scalar_prefetch=0,
            grid=(num_cores, steps),
            in_specs=[
                pl.BlockSpec((tm, W), lambda c, i: (c * steps + i, 0)),
                pl.BlockSpec((tm, k), lambda c, i: (c * steps + i, 0)),
            ],
            out_specs=pl.BlockSpec((1, 1), lambda c, i: (c, 0)),
        ),
        compiler_params=pltpu.CompilerParams(
            dimension_semantics=("parallel", "arbitrary"),
            vmem_limit_bytes=(32 << 20) if num_cores > 1 else (64 << 20),
        ),
        cost_estimate=cost,
    )(logits_packed, gcol)

    return jnp.sum(partial) / count


def cross_entropy_loss_forward(labels, logits, seq_length, m_length,
                               med_num, end_token):
    """JAX equivalent of cross_entropy_loss.forward.

    labels:     (B, S, K) int32  -- ground-truth med indices (k < m_length valid)
    logits:     (B, S, K, C)     -- per-slot class scores, C == med_num
    seq_length: (B,) int32       -- number of valid visits per patient
    m_length:   (B, S) int32     -- meds per visit (dense m_length_matrix)
    """
    B, S, K, C = logits.shape
    assert C == med_num

    j_idx = jnp.arange(S, dtype=jnp.int32)[None, :, None]       # (1, S, 1)
    k_idx = jnp.arange(K, dtype=jnp.int32)[None, None, :]       # (1, 1, K)
    m = m_length[:, :, None]                                    # (B, S, 1)

    valid = (j_idx < seq_length[:, None, None]) & (k_idx <= m)
    eff_labels = jnp.where(k_idx == m, end_token, labels)

    N = B * S * K
    return masked_cross_entropy_pallas(
        logits.reshape(N, C),
        eff_labels.reshape(N).astype(jnp.int32),
        valid.reshape(N),
    )


def _reference_loss(labels, logits, seq_length, m_length, med_num, end_token):
    """Pure-JAX reference mirroring the PyTorch loop (for sanity checking)."""
    B, S, K, C = logits.shape
    j_idx = jnp.arange(S)[None, :, None]
    k_idx = jnp.arange(K)[None, None, :]
    m = m_length[:, :, None]
    valid = ((j_idx < seq_length[:, None, None]) & (k_idx <= m)).reshape(-1)
    eff = jnp.where(k_idx == m, end_token, labels).reshape(-1)
    lg = logits.reshape(-1, C).astype(jnp.float32)
    logz = jax.nn.logsumexp(lg, axis=-1)
    ce = logz - jnp.take_along_axis(lg, eff[:, None], axis=-1)[:, 0]
    w = valid.astype(jnp.float32)
    return jnp.sum(ce * w) / jnp.sum(w)


def _run_case(key, B, S, max_meds, med_num, seq_length):
    k1, k2, k3 = jax.random.split(key, 3)
    K = max_meds + 1
    end_token = med_num - 1
    m_length = jax.random.randint(k1, (B, S), 0, max_meds + 1, dtype=jnp.int32)
    labels = jax.random.randint(k2, (B, S, K), 0, med_num - 1, dtype=jnp.int32)
    logits = jax.random.normal(k3, (B, S, K, med_num), dtype=jnp.float32)

    loss = cross_entropy_loss_forward(labels, logits, seq_length, m_length,
                                      med_num, end_token)
    loss = jax.block_until_ready(loss)
    ref = _reference_loss(labels, logits, seq_length, m_length,
                          med_num, end_token)
    assert jnp.allclose(loss, ref, rtol=1e-5, atol=1e-5), (loss, ref)


if __name__ == "__main__":
    key = jax.random.PRNGKey(0)
    ka, kb = jax.random.split(key)

    # Case 1: C=32 -> k=4 lane-dense repack, W=128, no grid padding.
    _run_case(ka, B=2, S=8, max_meds=3, med_num=32,
              seq_length=jnp.array([8, 5], dtype=jnp.int32))

    # Case 2: C=48 -> k=2, W=96 (< 128), exercises the grid-padding path.
    _run_case(kb, B=2, S=7, max_meds=2, med_num=48,
              seq_length=jnp.array([7, 4], dtype=jnp.int32))

    print("KERNEL_OK")
</pallas_src>

<mosaic_0001>
module attributes {stable_mosaic.version = 11 : i64} {
  func.func @_ce_kernel(%arg0: i32, %arg1: i32, %arg2: memref<8x128xf32, #tpu.memory_space<vmem>>, %arg3: memref<8x4xi32, #tpu.memory_space<vmem>>, %arg4: memref<1x1xf32, #tpu.memory_space<vmem>>) attributes {dimension_semantics = [#tpu.dimension_semantics<parallel>, #tpu.dimension_semantics<arbitrary>], iteration_bounds = array<i64: 1, 2>, scalar_prefetch = 0 : i64, scratch_operands = 0 : i64, tpu.core_type = #tpu.core_type<tc>, window_params = [{transform_indices = @transform_0, window_bounds = array<i64: 8, 128>}, {transform_indices = @transform_1, window_bounds = array<i64: 8, 4>}, {transform_indices = @transform_2, window_bounds = array<i64: 1, 1>}]} {
    %c0_i32 = arith.constant 0 : i32
    %0 = arith.cmpi eq, %arg1, %c0_i32 : i32
    %1 = arith.extui %0 : i1 to i32
    %c0_i32_0 = arith.constant 0 : i32
    %2 = arith.cmpi ne, %1, %c0_i32_0 : i32
    scf.if %2 {
      %cst_25 = arith.constant 0.000000e+00 : f32
      %97 = vector.broadcast %cst_25 : f32 to vector<1x1xf32>
      %c0_26 = arith.constant 0 : index
      %c0_27 = arith.constant 0 : index
      %98 = vector.load %arg4[%c0_26, %c0_27] : memref<1x1xf32, #tpu.memory_space<vmem>>, vector<1x1xf32>
      tpu.vector_store %arg4[%c0_26, %c0_27], %97 {strides = array<i32>} : memref<1x1xf32, #tpu.memory_space<vmem>>, vector<1x1xf32>,
    } else {
    }
    %c0 = arith.constant 0 : index
    %c0_1 = arith.constant 0 : index
    %3 = vector.load %arg2[%c0, %c0_1] : memref<8x128xf32, #tpu.memory_space<vmem>>, vector<8x128xf32>
    %c0_2 = arith.constant 0 : index
    %c0_3 = arith.constant 0 : index
    %4 = vector.load %arg3[%c0_2, %c0_3] : memref<8x4xi32, #tpu.memory_space<vmem>>, vector<8x4xi32>
    %5 = tpu.iota {dimensions = array<i32: 1>} : vector<1x128xi32>
    %cst = arith.constant dense<0xFF800000> : vector<8xf32>
    %6 = vector.multi_reduction <maximumf>, %3, %cst [1] : vector<8x128xf32> to vector<8xf32>
    %7 = vector.shape_cast %6 : vector<8xf32> to vector<8x1xf32>
    %8 = vector.broadcast %7 : vector<8x1xf32> to vector<8x128xf32>
    %9 = arith.subf %3, %8 : vector<8x128xf32>
    %10 = math.exp %9 : vector<8x128xf32>
    %cst_4 = arith.constant 0.000000e+00 : f32
    %11 = vector.broadcast %cst_4 : f32 to vector<8x128xf32>
    %12 = vector.extract_strided_slice %4 {offsets = [0, 0], sizes = [8, 1], strides = [1, 1]} : vector<8x4xi32> to vector<8x1xi32>
    %13 = vector.broadcast %5 : vector<1x128xi32> to vector<8x128xi32>
    %14 = vector.broadcast %12 : vector<8x1xi32> to vector<8x128xi32>
    %15 = arith.cmpi eq, %13, %14 : vector<8x128xi32>
    %16 = arith.select %15, %3, %11 : vector<8x128xi1>, vector<8x128xf32>
    %c0_i32_5 = arith.constant 0 : i32
    %17 = vector.broadcast %c0_i32_5 : i32 to vector<1x128xi32>
    %18 = arith.cmpi sge, %5, %17 : vector<1x128xi32>
    %c32_i32 = arith.constant 32 : i32
    %19 = vector.broadcast %c32_i32 : i32 to vector<1x128xi32>
    %20 = arith.cmpi slt, %5, %19 : vector<1x128xi32>
    %21 = arith.andi %18, %20 : vector<1x128xi1>
    %cst_6 = arith.constant 0.000000e+00 : f32
    %22 = vector.shape_cast %21 : vector<1x128xi1> to vector<1x128xi1>
    %23 = vector.broadcast %22 : vector<1x128xi1> to vector<8x128xi1>
    %24 = vector.broadcast %cst_6 : f32 to vector<8x128xf32>
    %25 = arith.select %23, %10, %24 : vector<8x128xi1>, vector<8x128xf32>
    %cst_7 = arith.constant dense<0.000000e+00> : vector<8xf32>
    %26 = vector.multi_reduction <add>, %25, %cst_7 [1] : vector<8x128xf32> to vector<8xf32>
    %27 = vector.shape_cast %26 : vector<8xf32> to vector<8x1xf32>
    %28 = vector.extract_strided_slice %4 {offsets = [0, 1], sizes = [8, 1], strides = [1, 1]} : vector<8x4xi32> to vector<8x1xi32>
    %29 = vector.broadcast %5 : vector<1x128xi32> to vector<8x128xi32>
    %30 = vector.broadcast %28 : vector<8x1xi32> to vector<8x128xi32>
    %31 = arith.cmpi eq, %29, %30 : vector<8x128xi32>
    %32 = arith.select %31, %3, %16 : vector<8x128xi1>, vector<8x128xf32>
    %c32_i32_8 = arith.constant 32 : i32
    %33 = vector.broadcast %c32_i32_8 : i32 to vector<1x128xi32>
    %34 = arith.cmpi sge, %5, %33 : vector<1x128xi32>
    %c64_i32 = arith.constant 64 : i32
    %35 = vector.broadcast %c64_i32 : i32 to vector<1x128xi32>
    %36 = arith.cmpi slt, %5, %35 : vector<1x128xi32>
    %37 = arith.andi %34, %36 : vector<1x128xi1>
    %cst_9 = arith.constant 0.000000e+00 : f32
    %38 = vector.shape_cast %37 : vector<1x128xi1> to vector<1x128xi1>
    %39 = vector.broadcast %38 : vector<1x128xi1> to vector<8x128xi1>
    %40 = vector.broadcast %cst_9 : f32 to vector<8x128xf32>
    %41 = arith.select %39, %10, %40 : vector<8x128xi1>, vector<8x128xf32>
    %cst_10 = arith.constant dense<0.000000e+00> : vector<8xf32>
    %42 = vector.multi_reduction <add>, %41, %cst_10 [1] : vector<8x128xf32> to vector<8xf32>
    %43 = vector.shape_cast %42 : vector<8xf32> to vector<8x1xf32>
    %44 = vector.extract_strided_slice %4 {offsets = [0, 2], sizes = [8, 1], strides = [1, 1]} : vector<8x4xi32> to vector<8x1xi32>
    %45 = vector.broadcast %5 : vector<1x128xi32> to vector<8x128xi32>
    %46 = vector.broadcast %44 : vector<8x1xi32> to vector<8x128xi32>
    %47 = arith.cmpi eq, %45, %46 : vector<8x128xi32>
    %48 = arith.select %47, %3, %32 : vector<8x128xi1>, vector<8x128xf32>
    %c64_i32_11 = arith.constant 64 : i32
    %49 = vector.broadcast %c64_i32_11 : i32 to vector<1x128xi32>
    %50 = arith.cmpi sge, %5, %49 : vector<1x128xi32>
    %c96_i32 = arith.constant 96 : i32
    %51 = vector.broadcast %c96_i32 : i32 to vector<1x128xi32>
    %52 = arith.cmpi slt, %5, %51 : vector<1x128xi32>
    %53 = arith.andi %50, %52 : vector<1x128xi1>
    %cst_12 = arith.constant 0.000000e+00 : f32
    %54 = vector.shape_cast %53 : vector<1x128xi1> to vector<1x128xi1>
    %55 = vector.broadcast %54 : vector<1x128xi1> to vector<8x128xi1>
    %56 = vector.broadcast %cst_12 : f32 to vector<8x128xf32>
    %57 = arith.select %55, %10, %56 : vector<8x128xi1>, vector<8x128xf32>
    %cst_13 = arith.constant dense<0.000000e+00> : vector<8xf32>
    %58 = vector.multi_reduction <add>, %57, %cst_13 [1] : vector<8x128xf32> to vector<8xf32>
    %59 = vector.shape_cast %58 : vector<8xf32> to vector<8x1xf32>
    %60 = vector.extract_strided_slice %4 {offsets = [0, 3], sizes = [8, 1], strides = [1, 1]} : vector<8x4xi32> to vector<8x1xi32>
    %61 = vector.broadcast %5 : vector<1x128xi32> to vector<8x128xi32>
    %62 = vector.broadcast %60 : vector<8x1xi32> to vector<8x128xi32>
    %63 = arith.cmpi eq, %61, %62 : vector<8x128xi32>
    %64 = arith.select %63, %3, %48 : vector<8x128xi1>, vector<8x128xf32>
    %c96_i32_14 = arith.constant 96 : i32
    %65 = vector.broadcast %c96_i32_14 : i32 to vector<1x128xi32>
    %66 = arith.cmpi sge, %5, %65 : vector<1x128xi32>
    %c128_i32 = arith.constant 128 : i32
    %67 = vector.broadcast %c128_i32 : i32 to vector<1x128xi32>
    %68 = arith.cmpi slt, %5, %67 : vector<1x128xi32>
    %69 = arith.andi %66, %68 : vector<1x128xi1>
    %cst_15 = arith.constant 0.000000e+00 : f32
    %70 = vector.shape_cast %69 : vector<1x128xi1> to vector<1x128xi1>
    %71 = vector.broadcast %70 : vector<1x128xi1> to vector<8x128xi1>
    %72 = vector.broadcast %cst_15 : f32 to vector<8x128xf32>
    %73 = arith.select %71, %10, %72 : vector<8x128xi1>, vector<8x128xf32>
    %cst_16 = arith.constant dense<0.000000e+00> : vector<8xf32>
    %74 = vector.multi_reduction <add>, %73, %cst_16 [1] : vector<8x128xf32> to vector<8xf32>
    %75 = vector.shape_cast %74 : vector<8xf32> to vector<8x1xf32>
    %76 = tpu.concatenate %27, %43, %59, %75 in 1 : vector<8x1xf32>, vector<8x1xf32>, vector<8x1xf32>, vector<8x1xf32> -> vector<8x4xf32>
    %c0_i32_17 = arith.constant 0 : i32
    %77 = vector.broadcast %c0_i32_17 : i32 to vector<8x4xi32>
    %78 = arith.cmpi sge, %4, %77 : vector<8x4xi32>
    %79 = math.log %76 : vector<8x4xf32>
    %80 = vector.broadcast %7 : vector<8x1xf32> to vector<8x4xf32>
    %81 = arith.addf %80, %79 : vector<8x4xf32>
    %cst_18 = arith.constant 0.000000e+00 : f32
    %82 = vector.broadcast %cst_18 : f32 to vector<8x4xf32>
    %83 = arith.select %78, %81, %82 : vector<8x4xi1>, vector<8x4xf32>
    %84 = vector.shape_cast %83 : vector<8x4xf32> to vector<1x8x4xf32>
    %cst_19 = arith.constant dense<0.000000e+00> : vector<1xf32>
    %85 = vector.multi_reduction <add>, %84, %cst_19 [1, 2] : vector<1x8x4xf32> to vector<1xf32>
    %86 = vector.shape_cast %85 : vector<1xf32> to vector<1x1x1xf32>
    %87 = vector.extract %86[0, 0, 0] : f32 from vector<1x1x1xf32>
    %88 = vector.shape_cast %64 : vector<8x128xf32> to vector<1x8x128xf32>
    %cst_20 = arith.constant dense<0.000000e+00> : vector<1xf32>
    %89 = vector.multi_reduction <add>, %88, %cst_20 [1, 2] : vector<1x8x128xf32> to vector<1xf32>
    %90 = vector.shape_cast %89 : vector<1xf32> to vector<1x1x1xf32>
    %91 = vector.extract %90[0, 0, 0] : f32 from vector<1x1x1xf32>
    %92 = arith.subf %87, %91 : f32
    %c0_21 = arith.constant 0 : index
    %c0_22 = arith.constant 0 : index
    %93 = vector.load %arg4[%c0_21, %c0_22] : memref<1x1xf32, #tpu.memory_space<vmem>>, vector<1x1xf32>
    %94 = vector.broadcast %92 : f32 to vector<1x1xf32>
    %95 = arith.addf %93, %94 : vector<1x1xf32>
    %c0_23 = arith.constant 0 : index
    %c0_24 = arith.constant 0 : index
    %96 = vector.load %arg4[%c0_23, %c0_24] : memref<1x1xf32, #tpu.memory_space<vmem>>, vector<1x1xf32>
    tpu.vector_store %arg4[%c0_23, %c0_24], %95 {strides = array<i32>} : memref<1x1xf32, #tpu.memory_space<vmem>>, vector<1x1xf32>,
    return
  }
  func.func @transform_0(%arg0: i32, %arg1: i32) -> (i32, i32) {
    %c2_i32 = arith.constant 2 : i32
    %0 = arith.muli %arg0, %c2_i32 : i32
    %1 = arith.addi %0, %arg1 : i32
    %c0_i32 = arith.constant 0 : i32
    %c0_i32_0 = arith.constant 0 : i32
    return %1, %c0_i32 : i32, i32
  }
  func.func @transform_1(%arg0: i32, %arg1: i32) -> (i32, i32) {
    %c2_i32 = arith.constant 2 : i32
    %0 = arith.muli %arg0, %c2_i32 : i32
    %1 = arith.addi %0, %arg1 : i32
    %c0_i32 = arith.constant 0 : i32
    %c0_i32_0 = arith.constant 0 : i32
    return %1, %c0_i32 : i32, i32
  }
  func.func @transform_2(%arg0: i32, %arg1: i32) -> (i32, i32) {
    %c0_i32 = arith.constant 0 : i32
    %c0_i32_0 = arith.constant 0 : i32
    return %arg0, %c0_i32 : i32, i32
  }
}

</mosaic_0001>

<llo_original>
// kernel: tpu_custom_call.1
$region0: #{tpu_custom_call.1}
  #allocation0 [shape = 'u32[]', space=smem, size = 0x4, offset = 0x4, fixed_abs, tag = 'smem constant byte address 0x4 - core index']
  #allocation1 [shape = 'u32[144,128]{1,0:T(1,128)}', space=vmem, size = 0x12000, scoped, tag = 'internal scratch']
  %s0 = inlined_call_operand.hbm [shape: f32[16,128], index: 0, kind: input, shape index: {}]
  %s1 = inlined_call_operand.hbm [shape: s32[16,4], index: 1, kind: input, shape index: {}]
  %s2 = inlined_call_operand.hbm [shape: f32[1,1], index: 2, kind: output, shape index: {}]
  %s3 = sld [smem:[#allocation0]]
  $region53: #{tpu_custom_call.1} parent=0
    _
  %s5 = ssub.s32 1, %s3
  %s6 = scalar_select 0, %s5, %s3
  $region1: #{tpu_custom_call.1} parent=0
    #allocation2 [shape = 'u8[8192]{0}', space=vmem, size = 0x2000, scoped, tag = 'input window, operand 0']
    #allocation3 [shape = 's32[2]{0}', space=sflag, size = 0x8, scoped, tag = 'scoped memory for tpu_custom_call.1']
    #allocation4 [shape = 's32[2]{0}', space=sflag, size = 0x8, scoped, tag = 'scoped memory for tpu_custom_call.1']
    #allocation5 [shape = 'u8[8192]{0}', space=vmem, size = 0x2000, scoped, tag = 'input window, operand 1']
    #allocation6 [shape = 's32[2]{0}', space=sflag, size = 0x8, scoped, tag = 'scoped memory for tpu_custom_call.1']
    #allocation7 [shape = 'u8[512]{0}', space=vmem, size = 0x400, scoped, tag = 'output window, operand 0, single buffered']
    %7 = vsyncpa [#allocation3], 0
    %s8 = scalar_lea.sflag [#allocation3], 1
    %9 = vsyncpa %s8, 0
    %10 = vsyncpa [#allocation6], 0
    %s11 = scalar_lea.sflag [#allocation6], 1
    %12 = vsyncpa %s11, 0
    %13 = vsyncpa [#allocation4], 0
    loop: start=0, step=1, limit=4
    $region2: #{tpu_custom_call.1} parent=1 // loop_pre_header
      _
    $region3: #{tpu_custom_call.1} parent=1 // loop_header
      %s15 = sphi 0, %s19
      %p16 = scmp.ge.s32.totalorder %s15, 4
      %s22 = sphi 0, %s34
      %s23 = sphi 0, %s30
      %s24 = sphi 0, %s22
      %s25 = sphi 0, %s23
      %s26 = sphi 0, %s24
      %s27 = sphi 0, %s25
      %s41 = sphi 0, %s43
      %s44 = sphi 0, %s41
      %s45 = sphi 0, %s44
      %s61 = sphi 0, %s45
      %s71 = sphi 0, %s73
      %s74 = sphi 0, %s71
      %s75 = sphi 0, %s74
      %s91 = sphi 0, %s75
      %s97 = sphi 0, %s99
      %s100 = sphi 0, %s97
      %s101 = sphi 0, %s100
      %s117 = sphi 0, %s101
    $region4: #{tpu_custom_call.1} parent=1 // loop_header_branch
      %18 = sbr.rel (%p16) target = $region8
    $region5: #{tpu_custom_call.1} parent=1 // loop_body
      %s20 = ssub.s32 %s15, 1
      %s21 = ssub.s32 %s15, 2
      %s28 = sadd.s32 1, %s23
      %p29 = scmp.ge.s32.totalorder %s28, 2
      %s30 = scalar_select %p29, 0, %s28
      %s31 = sadd.s32 1, %s22
      %s32 = scalar_select %p29, %s31, %s22
      %p33 = scmp.ge.s32.totalorder %s32, 1
      %s34 = scalar_select %p33, 0, %s32
      %s35 = smul.u32 %s22, 2
      %s36 = sadd.s32 %s35, %s23
      %s37 = smul.u32 %s34, 2
      %s38 = sadd.s32 %s37, %s30
      %s39 = ssub.s32 %s36, %s38
      %p40 = scmp.eq.s32.totalorder %s39, 0
      %s42 = sadd.s32 %s41, 1
      %s43 = scalar_select %p40, %s41, %s42
      %p46 = pneg %p40
      %p47 = scmp.eq.s32.totalorder %s15, 1
      %p48 = por %p46, %p47
      %p49 = scmp.ne.s32.totalorder %s41, %s44
      %p50 = scmp.eq.s32.totalorder %s15, 0
      %p51 = por %p49, %p50
      %p52 = scmp.ne.s32.totalorder %s41, %s44
      %p53 = scmp.eq.s32.totalorder %s20, 1
      %p54 = por %p52, %p53
      %p55 = scmp.ne.s32.totalorder %s44, %s45
      %p56 = scmp.eq.s32.totalorder %s20, 0
      %p57 = por %p55, %p56
      %p58 = scmp.ne.s32.totalorder %s44, %s45
      %p59 = scmp.eq.s32.totalorder %s21, 1
      %p60 = por %p58, %p59
      %p62 = scmp.ne.s32.totalorder %s45, %s61
      %p63 = scmp.eq.s32.totalorder %s21, 0
      %p64 = por %p62, %p63
      %s65 = smul.u32 %s22, 2
      %s66 = sadd.s32 %s65, %s23
      %s67 = smul.u32 %s34, 2
      %s68 = sadd.s32 %s67, %s30
      %s69 = ssub.s32 %s66, %s68
      %p70 = scmp.eq.s32.totalorder %s69, 0
      %s72 = sadd.s32 %s71, 1
      %s73 = scalar_select %p70, %s71, %s72
      %p76 = pneg %p70
      %p77 = scmp.eq.s32.totalorder %s15, 1
      %p78 = por %p76, %p77
      %p79 = scmp.ne.s32.totalorder %s71, %s74
      %p80 = scmp.eq.s32.totalorder %s15, 0
      %p81 = por %p79, %p80
      %p82 = scmp.ne.s32.totalorder %s71, %s74
      %p83 = scmp.eq.s32.totalorder %s20, 1
      %p84 = por %p82, %p83
      %p85 = scmp.ne.s32.totalorder %s74, %s75
      %p86 = scmp.eq.s32.totalorder %s20, 0
      %p87 = por %p85, %p86
      %p88 = scmp.ne.s32.totalorder %s74, %s75
      %p89 = scmp.eq.s32.totalorder %s21, 1
      %p90 = por %p88, %p89
      %p92 = scmp.ne.s32.totalorder %s75, %s91
      %p93 = scmp.eq.s32.totalorder %s21, 0
      %p94 = por %p92, %p93
      %s95 = ssub.s32 %s22, %s34
      %p96 = scmp.eq.s32.totalorder %s95, 0
      %s98 = sadd.s32 %s97, 1
      %s99 = scalar_select %p96, %s97, %s98
      %p102 = pneg %p96
      %p103 = scmp.eq.s32.totalorder %s15, 1
      %p104 = por %p102, %p103
      %p105 = scmp.ne.s32.totalorder %s97, %s100
      %p106 = scmp.eq.s32.totalorder %s15, 0
      %p107 = por %p105, %p106
      %p108 = scmp.ne.s32.totalorder %s97, %s100
      %p109 = scmp.eq.s32.totalorder %s20, 1
      %p110 = por %p108, %p109
      %p111 = scmp.ne.s32.totalorder %s100, %s101
      %p112 = scmp.eq.s32.totalorder %s20, 0
      %p113 = por %p111, %p112
      %p114 = scmp.ne.s32.totalorder %s100, %s101
      %p115 = scmp.eq.s32.totalorder %s21, 1
      %p116 = por %p114, %p115
      %p118 = scmp.ne.s32.totalorder %s101, %s117
      %p119 = scmp.eq.s32.totalorder %s21, 0
      %p120 = por %p118, %p119
      %p121 = scmp.le.s32.totalorder 1, %s15
      %p122 = scmp.lt.s32.totalorder %s15, 3
      %p123 = pnand %p121, %p122
      %p124 = pneg %p123
      // Predicated region
      $region9: #{tpu_custom_call.1} parent=5 // pred_check
        _
      $region10: #{tpu_custom_call.1} parent=5 // pred_check_branch
        %126 = sbr.rel (%p123) target = $region12
      $region11: #{tpu_custom_call.1} parent=5 // pred_region
        %s127 = ssub.s32 %s15, 1
      $region12: #{tpu_custom_call.1} parent=5 // pred_fallthru
        _
      %p128 = scmp.lt.s32.totalorder %s15, 2
      // Predicated region
      $region13: #{tpu_custom_call.1} parent=5 // pred_check
        %p129 = pneg %p128
      $region14: #{tpu_custom_call.1} parent=5 // pred_check_branch
        %131 = sbr.rel (%p129) target = $region16
      $region15: #{tpu_custom_call.1} parent=5 // pred_region
        // Predicated region
        $region17: #{tpu_custom_call.1} parent=15 // pred_check
          %p132 = pneg %p51
        $region18: #{tpu_custom_call.1} parent=15 // pred_check_branch
          %134 = sbr.rel (%p132) target = $region20
        $region19: #{tpu_custom_call.1} parent=15 // pred_region
          %s135 = sand.u32 %s41, 1
          %s136 = scalar_lea.sflag [#allocation3], %s135
          %s137 = sand.u32 %s41, 1
          %s138 = smul.addr %s137, 8
          %s139 = scalar_lea.vmem [#allocation2], %s138
          %s140 = smul.u32 %s22, 2
          %s141 = sadd.s32 %s140, %s23
          %s143 = ssub.s32 128, 128
          %144 = vsyncadd %s136, %s143
          %s145 = smul.addr %s141, 128
          %s146 = scalar_lea.hbm %s0, %s145
          %s148 = sshll.u32 %s139, 4
          %s149 = int_to_ptr.vmem [resolvable:$true] %s148
          %151 = dma.hbm_to_vmem [thread:$0]  %s146, 128, %s149, %s136
        $region20: #{tpu_custom_call.1} parent=15 // pred_fallthru
          _
        // Predicated region
        $region21: #{tpu_custom_call.1} parent=15 // pred_check
          %p152 = pneg %p81
        $region22: #{tpu_custom_call.1} parent=15 // pred_check_branch
          %154 = sbr.rel (%p152) target = $region24
        $region23: #{tpu_custom_call.1} parent=15 // pred_region
          %s155 = sand.u32 %s71, 1
          %s156 = scalar_lea.sflag [#allocation6], %s155
          %s157 = sand.u32 %s71, 1
          %s158 = smul.addr %s157, 8
          %s159 = scalar_lea.vmem [#allocation5], %s158
          %s160 = smul.u32 %s22, 2
          %s161 = sadd.s32 %s160, %s23
          %s163 = ssub.s32 128, 128
          %164 = vsyncadd %s156, %s163
          %s165 = smul.addr %s161, 128
          %s166 = scalar_lea.hbm %s1, %s165
          %s168 = sshll.u32 %s159, 4
          %s169 = int_to_ptr.vmem [resolvable:$true] %s168
          %171 = dma.hbm_to_vmem [thread:$0]  %s166, 128, %s169, %s156
        $region24: #{tpu_custom_call.1} parent=15 // pred_fallthru
          _
      $region16: #{tpu_custom_call.1} parent=5 // pred_fallthru
        _
      %p172 = scmp.le.s32.totalorder 1, %s15
      %p173 = scmp.lt.s32.totalorder %s15, 3
      %p174 = pnand %p172, %p173
      %p175 = pneg %p174
      // Predicated region
      $region25: #{tpu_custom_call.1} parent=5 // pred_check
        _
      $region26: #{tpu_custom_call.1} parent=5 // pred_check_branch
        %177 = sbr.rel (%p174) target = $region28
      $region27: #{tpu_custom_call.1} parent=5 // pred_region
        %s178 = ssub.s32 %s15, 1
        %s179 = sand.u32 %s44, 1
        %s180 = scalar_lea.sflag [#allocation3], %s179
        %s181 = sand.u32 %s44, 1
        %s182 = smul.addr %s181, 8
        %s183 = scalar_lea.vmem [#allocation2], %s182
        // Predicated region
        $region29: #{tpu_custom_call.1} parent=27 // pred_check
          %p184 = pneg %p57
        $region30: #{tpu_custom_call.1} parent=27 // pred_check_branch
          %186 = sbr.rel (%p184) target = $region32
        $region31: #{tpu_custom_call.1} parent=27 // pred_region
          %187 = dma.done %s180, 128
        $region32: #{tpu_custom_call.1} parent=27 // pred_fallthru
          _
        %s188 = sand.u32 %s74, 1
        %s189 = scalar_lea.sflag [#allocation6], %s188
        %s190 = sand.u32 %s74, 1
        %s191 = smul.addr %s190, 8
        %s192 = scalar_lea.vmem [#allocation5], %s191
        // Predicated region
        $region33: #{tpu_custom_call.1} parent=27 // pred_check
          %p193 = pneg %p87
        $region34: #{tpu_custom_call.1} parent=27 // pred_check_branch
          %195 = sbr.rel (%p193) target = $region36
        $region35: #{tpu_custom_call.1} parent=27 // pred_region
          %196 = dma.done %s189, 128
        $region36: #{tpu_custom_call.1} parent=27 // pred_fallthru
          _
        %s197 = sand.u32 %s44, 1
        %s198 = scalar_lea.sflag [#allocation3], %s197
        %s199 = sand.u32 %s44, 1
        %s200 = smul.addr %s199, 8
        %s201 = scalar_lea.vmem [#allocation2], %s200
        %p202 = pneg %p57
        %p203 = pneg %p54
        %s204 = sand.u32 %s74, 1
        %s205 = scalar_lea.sflag [#allocation6], %s204
        %s206 = sand.u32 %s74, 1
        %s207 = smul.addr %s206, 8
        %s208 = scalar_lea.vmem [#allocation5], %s207
        %p209 = pneg %p87
        %p210 = pneg %p84
        %p211 = pneg %p113
        %p212 = pneg %p110
        %s213 = smul.u32 %s24, 2
        %s214 = sadd.s32 %s213, %s25
        %s215 = smul.u32 %s24, 2
        %s216 = sadd.s32 %s215, %s25
        %p217 = scmp.eq.s32.totalorder %s25, 0
        // Predicated region
        $region37: #{tpu_custom_call.1} parent=27 // pred_check
          %p218 = pneg %p217
        $region38: #{tpu_custom_call.1} parent=27 // pred_check_branch
          %220 = sbr.rel (%p218) target = $region40
        $region39: #{tpu_custom_call.1} parent=27 // pred_region
          %vm221 = vcmask 0
          %222 = vst.msk [vmem:[#allocation7] sm:$0x1] %vm221, 0.0
        $region40: #{tpu_custom_call.1} parent=27 // pred_fallthru
          _
        %v223 = vld [vmem:[%s183] sm:$0xff]
        %v224 = vld [vmem:[%s192] sm:$0xff]
        %v225 = vlaneseq
        %v226 = vand.u32 %v225, 127
        %227 = vmax.xlane.f32.xlu0 %v223
        %v228 = vpop.xlane.xlu0 %227
        %v229 = vsub.f32 %v223, %v228
        %v230 = vmul.f32 %v229, 1.442695
        %v231 = vpow.pop %v230
        %232 = vset.pattern.permute.xlu0 0
        %233 = vperm.xlu0 %232, %v224
        %v234 = vpop.permute.xlu0 %233
        %vm235 = vcmp.eq.s32.totalorder %v226, %v234
        %v236 = vsel %vm235, %v223, 0.0
        %vm237 = vcmp.ge.s32.totalorder %v226, 0
        %vm238 = vcmp.lt.s32.totalorder %v226, 32
        %vm239 = vmand %vm237, %vm238
        %v240 = vsel %vm239, 1, 0
        %vm241 = vcmp.eq.s32.totalorder %v240, 1
        %v242 = vsel %vm241, %v231, 0.0
        %243 = vadd.xlane.f32.xlu0 %v242
        %v244 = vpop.xlane.xlu0 %243
        %245 = vset.pattern.permute.xlu0 1
        %246 = vperm.xlu0 %245, %v224
        %v247 = vpop.permute.xlu0 %246
        %vm248 = vcmp.eq.s32.totalorder %v226, %v247
        %v249 = vsel %vm248, %v223, %v236
        %vm250 = vcmp.ge.s32.totalorder %v226, 32
        %vm251 = vcmp.lt.s32.totalorder %v226, 64
        %vm252 = vmand %vm250, %vm251
        %v253 = vsel %vm252, 1, 0
        %vm254 = vcmp.eq.s32.totalorder %v253, 1
        %v255 = vsel %vm254, %v231, 0.0
        %256 = vadd.xlane.f32.xlu0 %v255
        %v257 = vpop.xlane.xlu0 %256
        %258 = vset.pattern.permute.xlu0 2
        %259 = vperm.xlu0 %258, %v224
        %v260 = vpop.permute.xlu0 %259
        %vm261 = vcmp.eq.s32.totalorder %v226, %v260
        %v262 = vsel %vm261, %v223, %v249
        %vm263 = vcmp.ge.s32.totalorder %v226, 64
        %vm264 = vcmp.lt.s32.totalorder %v226, 96
        %vm265 = vmand %vm263, %vm264
        %v266 = vsel %vm265, 1, 0
        %vm267 = vcmp.eq.s32.totalorder %v266, 1
        %v268 = vsel %vm267, %v231, 0.0
        %269 = vadd.xlane.f32.xlu0 %v268
        %v270 = vpop.xlane.xlu0 %269
        %271 = vset.pattern.permute.xlu0 3
        %272 = vperm.xlu0 %271, %v224
        %v273 = vpop.permute.xlu0 %272
        %vm274 = vcmp.eq.s32.totalorder %v226, %v273
        %v275 = vsel %vm274, %v223, %v262
        %vm276 = vcmp.ge.s32.totalorder %v226, 96
        %vm277 = vcmp.lt.s32.totalorder %v226, 128
        %vm278 = vmand %vm276, %vm277
        %v279 = vsel %vm278, 1, 0
        %vm280 = vcmp.eq.s32.totalorder %v279, 1
        %v281 = vsel %vm280, %v231, 0.0
        %282 = vadd.xlane.f32.xlu0 %v281
        %v283 = vpop.xlane.xlu0 %282
        %vm284 = vcmask 7168
        %v285 = vsel %vm284, %v244, %v257
        %vm286 = vcmask 15360
        %v287 = vsel %vm286, %v285, %v270
        %vm288 = vcmask 23552
        %v289 = vsel %vm288, %v287, %v283
        %vm290 = vcmp.ge.s32.totalorder %v224, 0
        %v291 = vlog2.pop %v289
        %v292 = vmul.f32 %v291, 0.6931472
        %v293 = vadd.f32 %v228, %v292
        %v294 = vsel %vm290, %v293, 0.0
        %vm295 = vcmask 31744
        %v296 = vsel %vm295, %v294, 0.0
        %297 = vadd.xlane.f32.xlu0 %v296
        %v298 = vpop.xlane.xlu0 %297
        %v299 = vrot.slane %v298, 4
        %v300 = vadd.f32 %v298, %v299
        %v301 = vrot.slane %v300, 2
        %v302 = vadd.f32 %v300, %v301
        %v303 = vrot.slane %v302, 1
        %v304 = vadd.f32 %v302, %v303
        %s305 = vtos %v304
        %306 = vadd.xlane.f32.xlu0 %v275
        %v307 = vpop.xlane.xlu0 %306
        %v308 = vrot.slane %v307, 4
        %v309 = vadd.f32 %v307, %v308
        %v310 = vrot.slane %v309, 2
        %v311 = vadd.f32 %v309, %v310
        %v312 = vrot.slane %v311, 1
        %v313 = vadd.f32 %v311, %v312
        %s314 = vtos %v313
        %s315 = ssub.f32 %s305, %s314
        %v316 = vld [vmem:[#allocation7] sm:$0x1]
        %v317 = vstv %s315
        %v318 = vadd.f32 %v316, %v317
        %vm319 = vcmask 0
        %320 = vst.msk [vmem:[#allocation7] sm:$0x1] %vm319, %v318
        // Predicated region
        $region41: #{tpu_custom_call.1} parent=27 // pred_check
          %p321 = pneg %p110
        $region42: #{tpu_custom_call.1} parent=27 // pred_check_branch
          %323 = sbr.rel (%p321) target = $region44
        $region43: #{tpu_custom_call.1} parent=27 // pred_region
          %s325 = ssub.s32 16, 16
          %326 = vsyncadd [#allocation4], %s325
          %s327 = smul.addr %s24, 16
          %s328 = scalar_lea.hbm %s2, %s327
          %s330 = sshll.u32 [#allocation7], 4
          %s331 = int_to_ptr.vmem [resolvable:$true] %s330
          %333 = dma.vmem_to_hbm [thread:$0]  %s331, 16, %s328, [#allocation4]
        $region44: #{tpu_custom_call.1} parent=27 // pred_fallthru
          _
        // Predicated region
        $region45: #{tpu_custom_call.1} parent=27 // pred_check
          %p334 = pneg %p110
        $region46: #{tpu_custom_call.1} parent=27 // pred_check_branch
          %336 = sbr.rel (%p334) target = $region48
        $region47: #{tpu_custom_call.1} parent=27 // pred_region
          %337 = dma.done [#allocation4], 16
        $region48: #{tpu_custom_call.1} parent=27 // pred_fallthru
          _
      $region28: #{tpu_custom_call.1} parent=5 // pred_fallthru
        _
      %p338 = scmp.le.s32.totalorder 2, %s15
      // Predicated region
      $region49: #{tpu_custom_call.1} parent=5 // pred_check
        %p339 = pneg %p338
      $region50: #{tpu_custom_call.1} parent=5 // pred_check_branch
        %341 = sbr.rel (%p339) target = $region52
      $region51: #{tpu_custom_call.1} parent=5 // pred_region
        %s342 = ssub.s32 %s15, 2
      $region52: #{tpu_custom_call.1} parent=5 // pred_fallthru
        _
    $region6: #{tpu_custom_call.1} parent=1 // loop_footer
      %s19 = sadd.s32 1, %s15
    $region7: #{tpu_custom_call.1} parent=1 // loop_footer_branch
      %14 = sbr.rel target = $region3
    $region8: #{tpu_custom_call.1} parent=1 // loop_exit
      _
    %343 = vsyncpa [#allocation3], 1
    %s344 = scalar_lea.sflag [#allocation3], 1
    %345 = vsyncpa %s344, 1
    %346 = vsyncpa [#allocation6], 1
    %s347 = scalar_lea.sflag [#allocation6], 1
    %348 = vsyncpa %s347, 1
    %349 = vsyncpa [#allocation4], 1
    %s350 = scalar_lea.sflag [#allocation4], 1
    %351 = vsyncpa %s350, 1

</llo_original>
